<compile_context>
chip_gen: v5e
topology: v5e:2x2
jax: 0.10.0
libtpu: 0.0.40
codegen_flags: <defaults>
</compile_context>

<pallas_src>
import functools

import jax
import jax.numpy as jnp
from jax import lax
from jax.experimental import pallas as pl
from jax.experimental.pallas import tpu as pltpu

SQRT_HALF = 0.7071067811865476  # 1/sqrt(2)
LN_EPS = 1e-5


def _round_up(x, m):
    return (x + m - 1) // m * m


def gelu_mlp_kernel(x_ref, w1_ref, b1_ref, g_ref, beta_ref, w2_ref, b2_ref,
                    o_ref, *, inv_n_in):
    x = x_ref[...]                                               # (tm, n_in)

    # Linear 1 on the MXU; accumulate in f32 regardless of operand dtype.
    h = jnp.dot(x, w1_ref[...], preferred_element_type=jnp.float32) + b1_ref[...]

    # Exact GELU (PyTorch nn.GELU default): 0.5*x*(1+erf(x/sqrt(2))).  f32 VPU/EUP.
    h = 0.5 * h * (1.0 + lax.erf(h * SQRT_HALF))

    # LayerNorm over features: one-pass mean / variance (sum + sum of squares
    # over a single read of h), biased variance, eps=1e-5.
    s1 = jnp.sum(h, axis=-1, keepdims=True)
    s2 = jnp.sum(h * h, axis=-1, keepdims=True)
    mu = s1 * inv_n_in
    var = jnp.maximum(s2 * inv_n_in - mu * mu, 0.0)
    hn = (h - mu) * lax.rsqrt(var + LN_EPS)
    hn = hn * g_ref[...] + beta_ref[...]

    # Linear 2 on the MXU; operands cast to the matmul dtype (bf16 fast path).
    hn = hn.astype(w2_ref.dtype)
    o_ref[...] = (jnp.dot(hn, w2_ref[...], preferred_element_type=jnp.float32)
                  + b2_ref[...]).astype(o_ref.dtype)


@functools.partial(jax.jit, static_argnames=("tm", "matmul_dtype"))
def gelu_mlp(x, w1, b1, gamma, beta, w2, b2, *, tm=256, matmul_dtype=jnp.float32):
    """x: [..., n_in] -> [..., n_out]. Linear weights pre-transposed to [in, out]."""
    orig_shape = x.shape
    n_in = orig_shape[-1]
    n_out = w2.shape[-1]
    out_dtype = x.dtype

    x2 = x.reshape(-1, n_in)
    n_rows = x2.shape[0]

    # Row tile: big to amortize per-step overhead / fill the MXU, but clamped
    # for small inputs; keep a multiple of 16 (covers f32 and bf16 sublanes).
    tm = int(min(tm, _round_up(n_rows, 16)))
    tm = _round_up(max(tm, 16), 16)
    n_rows_p = _round_up(n_rows, tm)

    # Lane-dense output: pad n_out to a multiple of 128 (unmasked vst).
    n_out_p = _round_up(n_out, 128)
    # NOTE: n_in is kept at its true size (full-array block); padding it would
    # require masked LayerNorm statistics.  Real deployments should pick
    # n_in as a multiple of 128.

    if n_rows_p != n_rows:
        x2 = jnp.pad(x2, ((0, n_rows_p - n_rows), (0, 0)))
    if n_out_p != n_out:
        w2 = jnp.pad(w2, ((0, 0), (0, n_out_p - n_out)))
        b2 = jnp.pad(b2, (0, n_out_p - n_out))

    # Matmul operands in matmul_dtype (bf16 halves weight DMA bytes and uses
    # the fast MXU path on v6e/v7x); biases / LN params stay f32.
    x2 = x2.astype(matmul_dtype)
    w1 = w1.astype(matmul_dtype)
    w2 = w2.astype(matmul_dtype)

    b1_2 = b1.reshape(1, n_in).astype(jnp.float32)
    g_2 = gamma.reshape(1, n_in).astype(jnp.float32)
    be_2 = beta.reshape(1, n_in).astype(jnp.float32)
    b2_2 = b2.reshape(1, n_out_p).astype(jnp.float32)

    grid = (n_rows_p // tm,)

    # Explicit VMEM budget: double-buffered tiles + resident weights + f32
    # intermediates, with headroom (never rely on the scoped default).
    mm_bytes = jnp.dtype(matmul_dtype).itemsize
    out_bytes = jnp.dtype(out_dtype).itemsize
    est = (2 * tm * n_in * mm_bytes            # x tile (double buffered)
           + 2 * n_in * n_in * mm_bytes        # W1 (resident, 2 buffers)
           + 2 * n_in * n_out_p * mm_bytes     # W2 (resident, 2 buffers)
           + 2 * (3 * n_in + n_out_p) * 4      # b1, gamma, beta, b2
           + 2 * tm * n_out_p * out_bytes      # out tile (double buffered)
           + 2 * tm * n_in * 4)                # f32 h / hn intermediates
    vmem_limit = int(min(100 << 20, max(32 << 20, 2 * est)))

    cost = pl.CostEstimate(
        flops=2 * n_rows_p * n_in * (n_in + n_out_p),
        transcendentals=n_rows_p * n_in,
        bytes_accessed=int(x2.size * mm_bytes + w1.size * mm_bytes
                           + w2.size * mm_bytes + n_rows_p * n_out_p * out_bytes),
    )

    kernel = functools.partial(gelu_mlp_kernel, inv_n_in=1.0 / n_in)

    out = pl.pallas_call(
        kernel,
        out_shape=jax.ShapeDtypeStruct((n_rows_p, n_out_p), out_dtype),
        grid_spec=pltpu.PrefetchScalarGridSpec(
            num_scalar_prefetch=0,
            grid=grid,
            in_specs=[
                pl.BlockSpec((tm, n_in), lambda i: (i, 0)),       # x tile
                pl.BlockSpec((n_in, n_in), lambda i: (0, 0)),     # W1 (full)
                pl.BlockSpec((1, n_in), lambda i: (0, 0)),        # b1
                pl.BlockSpec((1, n_in), lambda i: (0, 0)),        # gamma
                pl.BlockSpec((1, n_in), lambda i: (0, 0)),        # beta
                pl.BlockSpec((n_in, n_out_p), lambda i: (0, 0)),  # W2 (full)
                pl.BlockSpec((1, n_out_p), lambda i: (0, 0)),     # b2
            ],
            out_specs=pl.BlockSpec((tm, n_out_p), lambda i: (i, 0)),
        ),
        compiler_params=pltpu.CompilerParams(
            dimension_semantics=("parallel",),
            vmem_limit_bytes=vmem_limit),
        cost_estimate=cost,
    )(x2, w1, b1_2, g_2, be_2, w2, b2_2)

    out = out[:n_rows, :n_out]
    return out.reshape(*orig_shape[:-1], n_out)


def xavier_uniform(key, fan_in, fan_out, dtype=jnp.float32):
    bound = (6.0 / (fan_in + fan_out)) ** 0.5
    # PyTorch weight is [out, in]; sample that and transpose to [in, out].
    w = jax.random.uniform(key, (fan_out, fan_in), dtype, minval=-bound, maxval=bound)
    return w.T


def reference_mlp(x, w1, b1, gamma, beta, w2, b2):
    h = x @ w1 + b1
    h = 0.5 * h * (1.0 + lax.erf(h * SQRT_HALF))
    mu = jnp.mean(h, axis=-1, keepdims=True)
    var = jnp.mean((h - mu) ** 2, axis=-1, keepdims=True)
    hn = (h - mu) / jnp.sqrt(var + LN_EPS) * gamma + beta
    return hn @ w2 + b2


if __name__ == "__main__":
    key = jax.random.PRNGKey(0)
    k_x, k_w1, k_b1, k_w2, k_b2 = jax.random.split(key, 5)

    batch, seq, n_in, n_out = 2, 8, 32, 16
    x = jax.random.normal(k_x, (batch, seq, n_in), jnp.float32)

    # Deterministic parameter init mirroring the module's __init__ shapes.
    w1 = xavier_uniform(k_w1, n_in, n_in)                       # [in, in]
    b1 = 0.01 * jax.random.normal(k_b1, (n_in,), jnp.float32)
    gamma = jnp.ones((n_in,), jnp.float32)                      # LayerNorm weight
    beta = jnp.zeros((n_in,), jnp.float32)                      # LayerNorm bias
    w2 = xavier_uniform(k_w2, n_in, n_out)                      # [in, out]
    b2 = 0.01 * jax.random.normal(k_b2, (n_out,), jnp.float32)

    y_ref = reference_mlp(x, w1, b1, gamma, beta, w2, b2)

    # f32 matmul-operand path: matches the PyTorch/f32 reference tightly.
    y = gelu_mlp(x, w1, b1, gamma, beta, w2, b2, tm=256, matmul_dtype=jnp.float32)
    y = jax.block_until_ready(y)
    assert y.shape == (batch, seq, n_out)
    assert jnp.allclose(y, y_ref, atol=1e-5, rtol=1e-5), "f32 mismatch vs reference"

    # bf16 matmul-operand fast path (v6e/v7x MXU); f32 accumulation + f32
    # elementwise, so only operand-rounding error vs the f32 reference.
    y_bf16 = gelu_mlp(x, w1, b1, gamma, beta, w2, b2, tm=256, matmul_dtype=jnp.bfloat16)
    y_bf16 = jax.block_until_ready(y_bf16)
    assert y_bf16.shape == (batch, seq, n_out)
    assert jnp.allclose(y_bf16, y_ref, atol=1e-1, rtol=1e-1), "bf16 mismatch vs reference"

    print("KERNEL_OK")
</pallas_src>

<mosaic_0001>
module attributes {stable_mosaic.version = 11 : i64} {
  func.func @gelu_mlp_kernel(%arg0: i32, %arg1: memref<16x32xf32, #tpu.memory_space<vmem>>, %arg2: memref<32x32xf32, #tpu.memory_space<vmem>>, %arg3: memref<1x32xf32, #tpu.memory_space<vmem>>, %arg4: memref<1x32xf32, #tpu.memory_space<vmem>>, %arg5: memref<1x32xf32, #tpu.memory_space<vmem>>, %arg6: memref<32x128xf32, #tpu.memory_space<vmem>>, %arg7: memref<1x128xf32, #tpu.memory_space<vmem>>, %arg8: memref<16x128xf32, #tpu.memory_space<vmem>>) attributes {dimension_semantics = [#tpu.dimension_semantics<parallel>], iteration_bounds = array<i64: 1>, scalar_prefetch = 0 : i64, scratch_operands = 0 : i64, tpu.core_type = #tpu.core_type<tc>, window_params = [{transform_indices = @transform_0, window_bounds = array<i64: 16, 32>}, {pipeline_mode = #tpu.pipeline_mode<synchronous>, transform_indices = @transform_1, window_bounds = array<i64: 32, 32>}, {pipeline_mode = #tpu.pipeline_mode<synchronous>, transform_indices = @transform_2, window_bounds = array<i64: 1, 32>}, {pipeline_mode = #tpu.pipeline_mode<synchronous>, transform_indices = @transform_3, window_bounds = array<i64: 1, 32>}, {pipeline_mode = #tpu.pipeline_mode<synchronous>, transform_indices = @transform_4, window_bounds = array<i64: 1, 32>}, {pipeline_mode = #tpu.pipeline_mode<synchronous>, transform_indices = @transform_5, window_bounds = array<i64: 32, 128>}, {pipeline_mode = #tpu.pipeline_mode<synchronous>, transform_indices = @transform_6, window_bounds = array<i64: 1, 128>}, {transform_indices = @transform_7, window_bounds = array<i64: 16, 128>}]} {
    %c0 = arith.constant 0 : index
    %c0_0 = arith.constant 0 : index
    %0 = vector.load %arg1[%c0, %c0_0] : memref<16x32xf32, #tpu.memory_space<vmem>>, vector<16x32xf32>
    %c0_1 = arith.constant 0 : index
    %c0_2 = arith.constant 0 : index
    %1 = vector.load %arg2[%c0_1, %c0_2] : memref<32x32xf32, #tpu.memory_space<vmem>>, vector<32x32xf32>
    %cst = arith.constant dense<0.000000e+00> : vector<16x32xf32>
    %2 = tpu.matmul %0, %1, %cst {dimension_numbers = #tpu.dot_dimension_numbers<[1], [0], [0], [1], [0, 0, 1, 1], [], []>} : vector<16x32xf32>, vector<32x32xf32>, vector<16x32xf32> -> vector<16x32xf32>
    %c0_3 = arith.constant 0 : index
    %c0_4 = arith.constant 0 : index
    %3 = vector.load %arg3[%c0_3, %c0_4] : memref<1x32xf32, #tpu.memory_space<vmem>>, vector<1x32xf32>
    %4 = vector.broadcast %3 : vector<1x32xf32> to vector<16x32xf32>
    %5 = arith.addf %2, %4 : vector<16x32xf32>
    %cst_5 = arith.constant 5.000000e-01 : f32
    %6 = vector.broadcast %cst_5 : f32 to vector<16x32xf32>
    %7 = arith.mulf %6, %5 : vector<16x32xf32>
    %cst_6 = arith.constant 0.707106769 : f32
    %8 = vector.broadcast %cst_6 : f32 to vector<16x32xf32>
    %9 = arith.mulf %5, %8 : vector<16x32xf32>
    %10 = math.erf %9 : vector<16x32xf32>
    %cst_7 = arith.constant 1.000000e+00 : f32
    %11 = vector.broadcast %cst_7 : f32 to vector<16x32xf32>
    %12 = arith.addf %11, %10 : vector<16x32xf32>
    %13 = arith.mulf %7, %12 : vector<16x32xf32>
    %cst_8 = arith.constant dense<0.000000e+00> : vector<16xf32>
    %14 = vector.multi_reduction <add>, %13, %cst_8 [1] : vector<16x32xf32> to vector<16xf32>
    %15 = vector.shape_cast %14 : vector<16xf32> to vector<16x1xf32>
    %16 = arith.mulf %13, %13 : vector<16x32xf32>
    %cst_9 = arith.constant dense<0.000000e+00> : vector<16xf32>
    %17 = vector.multi_reduction <add>, %16, %cst_9 [1] : vector<16x32xf32> to vector<16xf32>
    %18 = vector.shape_cast %17 : vector<16xf32> to vector<16x1xf32>
    %cst_10 = arith.constant 3.125000e-02 : f32
    %19 = vector.broadcast %cst_10 : f32 to vector<16x1xf32>
    %20 = arith.mulf %15, %19 : vector<16x1xf32>
    %cst_11 = arith.constant 3.125000e-02 : f32
    %21 = vector.broadcast %cst_11 : f32 to vector<16x1xf32>
    %22 = arith.mulf %18, %21 : vector<16x1xf32>
    %23 = arith.mulf %20, %20 : vector<16x1xf32>
    %24 = arith.subf %22, %23 : vector<16x1xf32>
    %cst_12 = arith.constant 0.000000e+00 : f32
    %25 = vector.broadcast %cst_12 : f32 to vector<16x1xf32>
    %26 = arith.maximumf %24, %25 : vector<16x1xf32>
    %27 = vector.broadcast %20 : vector<16x1xf32> to vector<16x32xf32>
    %28 = arith.subf %13, %27 : vector<16x32xf32>
    %cst_13 = arith.constant 9.99999974E-6 : f32
    %29 = vector.broadcast %cst_13 : f32 to vector<16x1xf32>
    %30 = arith.addf %26, %29 : vector<16x1xf32>
    %31 = math.rsqrt %30 : vector<16x1xf32>
    %32 = vector.broadcast %31 : vector<16x1xf32> to vector<16x32xf32>
    %33 = arith.mulf %28, %32 : vector<16x32xf32>
    %c0_14 = arith.constant 0 : index
    %c0_15 = arith.constant 0 : index
    %34 = vector.load %arg4[%c0_14, %c0_15] : memref<1x32xf32, #tpu.memory_space<vmem>>, vector<1x32xf32>
    %35 = vector.broadcast %34 : vector<1x32xf32> to vector<16x32xf32>
    %36 = arith.mulf %33, %35 : vector<16x32xf32>
    %c0_16 = arith.constant 0 : index
    %c0_17 = arith.constant 0 : index
    %37 = vector.load %arg5[%c0_16, %c0_17] : memref<1x32xf32, #tpu.memory_space<vmem>>, vector<1x32xf32>
    %38 = vector.broadcast %37 : vector<1x32xf32> to vector<16x32xf32>
    %39 = arith.addf %36, %38 : vector<16x32xf32>
    %c0_18 = arith.constant 0 : index
    %c0_19 = arith.constant 0 : index
    %40 = vector.load %arg6[%c0_18, %c0_19] : memref<32x128xf32, #tpu.memory_space<vmem>>, vector<32x128xf32>
    %cst_20 = arith.constant dense<0.000000e+00> : vector<16x128xf32>
    %41 = tpu.matmul %39, %40, %cst_20 {dimension_numbers = #tpu.dot_dimension_numbers<[1], [0], [0], [1], [0, 0, 1, 1], [], []>} : vector<16x32xf32>, vector<32x128xf32>, vector<16x128xf32> -> vector<16x128xf32>
    %c0_21 = arith.constant 0 : index
    %c0_22 = arith.constant 0 : index
    %42 = vector.load %arg7[%c0_21, %c0_22] : memref<1x128xf32, #tpu.memory_space<vmem>>, vector<1x128xf32>
    %43 = vector.broadcast %42 : vector<1x128xf32> to vector<16x128xf32>
    %44 = arith.addf %41, %43 : vector<16x128xf32>
    %c0_23 = arith.constant 0 : index
    %c0_24 = arith.constant 0 : index
    %45 = vector.load %arg8[%c0_23, %c0_24] : memref<16x128xf32, #tpu.memory_space<vmem>>, vector<16x128xf32>
    tpu.vector_store %arg8[%c0_23, %c0_24], %44 {strides = array<i32>} : memref<16x128xf32, #tpu.memory_space<vmem>>, vector<16x128xf32>,
    return
  }
  func.func @transform_0(%arg0: i32) -> (i32, i32) {
    %c0_i32 = arith.constant 0 : i32
    %c0_i32_0 = arith.constant 0 : i32
    return %arg0, %c0_i32 : i32, i32
  }
  func.func @transform_1(%arg0: i32) -> (i32, i32) {
    %c0_i32 = arith.constant 0 : i32
    %c0_i32_0 = arith.constant 0 : i32
    %c0_i32_1 = arith.constant 0 : i32
    return %c0_i32, %c0_i32_0 : i32, i32
  }
  func.func @transform_2(%arg0: i32) -> (i32, i32) {
    %c0_i32 = arith.constant 0 : i32
    %c0_i32_0 = arith.constant 0 : i32
    %c0_i32_1 = arith.constant 0 : i32
    return %c0_i32, %c0_i32_0 : i32, i32
  }
  func.func @transform_3(%arg0: i32) -> (i32, i32) {
    %c0_i32 = arith.constant 0 : i32
    %c0_i32_0 = arith.constant 0 : i32
    %c0_i32_1 = arith.constant 0 : i32
    return %c0_i32, %c0_i32_0 : i32, i32
  }
  func.func @transform_4(%arg0: i32) -> (i32, i32) {
    %c0_i32 = arith.constant 0 : i32
    %c0_i32_0 = arith.constant 0 : i32
    %c0_i32_1 = arith.constant 0 : i32
    return %c0_i32, %c0_i32_0 : i32, i32
  }
  func.func @transform_5(%arg0: i32) -> (i32, i32) {
    %c0_i32 = arith.constant 0 : i32
    %c0_i32_0 = arith.constant 0 : i32
    %c0_i32_1 = arith.constant 0 : i32
    return %c0_i32, %c0_i32_0 : i32, i32
  }
  func.func @transform_6(%arg0: i32) -> (i32, i32) {
    %c0_i32 = arith.constant 0 : i32
    %c0_i32_0 = arith.constant 0 : i32
    %c0_i32_1 = arith.constant 0 : i32
    return %c0_i32, %c0_i32_0 : i32, i32
  }
  func.func @transform_7(%arg0: i32) -> (i32, i32) {
    %c0_i32 = arith.constant 0 : i32
    %c0_i32_0 = arith.constant 0 : i32
    return %arg0, %c0_i32 : i32, i32
  }
}

</mosaic_0001>

<llo_original>
// kernel: gelu_mlp.1
$region0: #{gelu_mlp.1}
  #allocation0 [shape = 'u32[]', space=smem, size = 0x4, offset = 0x4, fixed_abs, tag = 'smem constant byte address 0x4 - core index']
  #allocation1 [shape = 'u32[72,128]{1,0:T(1,128)}', space=vmem, size = 0x9000, scoped, tag = 'internal scratch']
  %s0 = inlined_call_operand.vmem [shape: f32[16,32], index: 0, kind: input, shape index: {}]
  %s1 = inlined_call_operand.vmem [shape: f32[32,32], index: 1, kind: input, shape index: {}]
  %s2 = inlined_call_operand.vmem [shape: f32[1,32], index: 2, kind: input, shape index: {}]
  %s3 = inlined_call_operand.vmem [shape: f32[1,32], index: 3, kind: input, shape index: {}]
  %s4 = inlined_call_operand.vmem [shape: f32[1,32], index: 4, kind: input, shape index: {}]
  %s5 = inlined_call_operand.vmem [shape: f32[32,128], index: 5, kind: input, shape index: {}]
  %s6 = inlined_call_operand.vmem [shape: f32[1,128], index: 6, kind: input, shape index: {}]
  %s7 = inlined_call_operand.vmem [shape: f32[16,128], index: 7, kind: output, shape index: {}]
  %s8 = sld [smem:[#allocation0]]
  $region38: #{gelu_mlp.1} parent=0
    _
  %s10 = ssub.s32 1, %s8
  %s11 = scalar_select 0, %s10, %s8
  // Predicated region
  $region2: #{gelu_mlp.1} parent=0 // pred_check
    _
  $region3: #{gelu_mlp.1} parent=0 // pred_check_branch
    %13 = sbr.rel (0) target = $region5
  $region4: #{gelu_mlp.1} parent=0 // pred_region
    _
  $region5: #{gelu_mlp.1} parent=0 // pred_fallthru
    _
  // Predicated region
  $region6: #{gelu_mlp.1} parent=0 // pred_check
    _
  $region7: #{gelu_mlp.1} parent=0 // pred_check_branch
    %15 = sbr.rel (0) target = $region9
  $region8: #{gelu_mlp.1} parent=0 // pred_region
    _
  $region9: #{gelu_mlp.1} parent=0 // pred_fallthru
    _
  // Predicated region
  $region10: #{gelu_mlp.1} parent=0 // pred_check
    _
  $region11: #{gelu_mlp.1} parent=0 // pred_check_branch
    %17 = sbr.rel (0) target = $region13
  $region12: #{gelu_mlp.1} parent=0 // pred_region
    _
  $region13: #{gelu_mlp.1} parent=0 // pred_fallthru
    _
  // Predicated region
  $region14: #{gelu_mlp.1} parent=0 // pred_check
    _
  $region15: #{gelu_mlp.1} parent=0 // pred_check_branch
    %19 = sbr.rel (0) target = $region17
  $region16: #{gelu_mlp.1} parent=0 // pred_region
    _
  $region17: #{gelu_mlp.1} parent=0 // pred_fallthru
    _
  // Predicated region
  $region18: #{gelu_mlp.1} parent=0 // pred_check
    _
  $region19: #{gelu_mlp.1} parent=0 // pred_check_branch
    %21 = sbr.rel (0) target = $region21
  $region20: #{gelu_mlp.1} parent=0 // pred_region
    _
  $region21: #{gelu_mlp.1} parent=0 // pred_fallthru
    _
  // Predicated region
  $region22: #{gelu_mlp.1} parent=0 // pred_check
    _
  $region23: #{gelu_mlp.1} parent=0 // pred_check_branch
    %23 = sbr.rel (0) target = $region25
  $region24: #{gelu_mlp.1} parent=0 // pred_region
    _
  $region25: #{gelu_mlp.1} parent=0 // pred_fallthru
    _
  // Predicated region
  $region26: #{gelu_mlp.1} parent=0 // pred_check
    _
  $region27: #{gelu_mlp.1} parent=0 // pred_check_branch
    %25 = sbr.rel (0) target = $region29
  $region28: #{gelu_mlp.1} parent=0 // pred_region
    _
  $region29: #{gelu_mlp.1} parent=0 // pred_fallthru
    _
  %v26 = vld [vmem:[%s0] sm:$0xff]
  %v27 = vld [vmem:[%s0 + $0x8] sm:$0xff]
  %v28 = vld [vmem:[%s1] sm:$0xff]
  %v29 = vld [vmem:[%s1 + $0x8] sm:$0xff]
  %v30 = vld [vmem:[%s1 + $0x10] sm:$0xff]
  %v31 = vld [vmem:[%s1 + $0x18] sm:$0xff]
  %v32 = vld [vmem:[%s2] sm:$0x1]
  %v34 = vperm.slane %v32, 0
  %vm36 = vcmask 261120
  %v38 = vsel %vm36, %v26, 0
  %v41 = vsel %vm36, %v27, 0
  %43 = vmatpush.msra.mxu0 0.0
  %44 = vmatpush.msra.mxu0 0.0
  %45 = vmatpush.msra.mxu0 0.0
  %46 = vmatpush.msra.mxu0 0.0
  %47 = vmatpush.msra.mxu0 0.0
  %48 = vmatpush.msra.mxu0 0.0
  %49 = vmatpush.msra.mxu0 0.0
  %50 = vmatpush.msra.mxu0 0.0
  %51 = vmatpush.msra.mxu0 0.0
  %52 = vmatpush.msra.mxu0 0.0
  %53 = vmatpush.msra.mxu0 0.0
  %54 = vmatpush.msra.mxu0 0.0
  %55 = vmatpush.msra.mxu0 %v31
  %56 = vmatpush.msra.mxu0 %v30
  %57 = vmatpush.msra.mxu0 %v29
  %58 = vmatpush.msra.mxu0 %v28
  %59 = vmatmul.f32.gmra.mxu0 %v38
  %v60 = vpop.f32.mrf.mxu0
  %v61 = vadd.f32 %v34, %v60
  %62 = vmatmul.f32.gmra.mxu0 %v41
  %v63 = vpop.f32.mrf.mxu0
  %v64 = vadd.f32 %v34, %v63
  %65 = vdwg.mxu0
  %v66 = vmul.f32 %v61, 0.5
  %v67 = vmul.f32 %v64, 0.5
  %v68 = vmul.f32 %v61, 0.70710677
  %v69 = vmul.f32 %v64, 0.70710677
  %v70 = vmul.f32 %v68, %v68
  %v71 = vmin.f32 16.0, %v70
  %v72 = vmul.f32 %v71, 2.1237322e-06
  %v73 = vadd.f32 %v72, 0.00028619796
  %v74 = vmul.f32 %v71, %v73
  %v75 = vadd.f32 %v74, 0.0036580483
  %v76 = vmul.f32 %v71, %v75
  %v77 = vadd.f32 %v76, 0.05243302
  %v78 = vmul.f32 %v71, %v77
  %v79 = vadd.f32 %v78, 0.18741608
  %v80 = vmul.f32 %v71, %v79
  %v81 = vadd.f32 %v80, 1.1283791
  %v82 = vmul.f32 %v68, %v81
  %v83 = vmul.f32 %v71, 3.8918573e-05
  %v84 = vadd.f32 %v83, 0.001143296
  %v85 = vmul.f32 %v71, %v84
  %v86 = vadd.f32 %v85, 0.014752088
  %v87 = vmul.f32 %v71, %v86
  %v88 = vadd.f32 %v87, 0.112945676
  %v89 = vmul.f32 %v71, %v88
  %v90 = vadd.f32 %v89, 0.4994258
  %v91 = vmul.f32 %v71, %v90
  %v92 = vadd.f32 %v91, 1.0
  %v93 = vrcp.pop %v92
  %v94 = vmul.f32 %v92, %v93
  %v95 = vsub.f32 1.0, %v94
  %v96 = vmul.f32 %v93, %v95
  %v97 = vadd.f32 %v93, %v96
  %vm98 = vweird.f32 %v92
  %vm99 = vweird.f32 %v93
  %vm100 = vmor %vm98, %vm99
  %v101 = vsel %vm100, %v93, %v97
  %v102 = vand.u32 2147483647, %v92
  %vm103 = vcmp.eq.f32.partialorder %v102, 8.507059e+37
  %v104 = vand.u32 %v92, 2147483648
  %v105 = vor.u32 1.1754944e-38, %v104
  %v106 = vsel %vm103, %v105, %v101
  %v107 = vmul.f32 %v82, %v106
  %v108 = vmin.f32 %v107, 1.0
  %v109 = vmax.f32 %v108, -1.0
  %v110 = vmul.f32 %v69, %v69
  %v111 = vmin.f32 16.0, %v110
  %v112 = vmul.f32 %v111, 2.1237322e-06
  %v113 = vadd.f32 %v112, 0.00028619796
  %v114 = vmul.f32 %v111, %v113
  %v115 = vadd.f32 %v114, 0.0036580483
  %v116 = vmul.f32 %v111, %v115
  %v117 = vadd.f32 %v116, 0.05243302
  %v118 = vmul.f32 %v111, %v117
  %v119 = vadd.f32 %v118, 0.18741608
  %v120 = vmul.f32 %v111, %v119
  %v121 = vadd.f32 %v120, 1.1283791
  %v122 = vmul.f32 %v69, %v121
  %v123 = vmul.f32 %v111, 3.8918573e-05
  %v124 = vadd.f32 %v123, 0.001143296
  %v125 = vmul.f32 %v111, %v124
  %v126 = vadd.f32 %v125, 0.014752088
  %v127 = vmul.f32 %v111, %v126
  %v128 = vadd.f32 %v127, 0.112945676
  %v129 = vmul.f32 %v111, %v128
  %v130 = vadd.f32 %v129, 0.4994258
  %v131 = vmul.f32 %v111, %v130
  %v132 = vadd.f32 %v131, 1.0
  %v133 = vrcp.pop %v132
  %v134 = vmul.f32 %v132, %v133
  %v135 = vsub.f32 1.0, %v134
  %v136 = vmul.f32 %v133, %v135
  %v137 = vadd.f32 %v133, %v136
  %vm138 = vweird.f32 %v132
  %vm139 = vweird.f32 %v133
  %vm140 = vmor %vm138, %vm139
  %v141 = vsel %vm140, %v133, %v137
  %v142 = vand.u32 2147483647, %v132
  %vm143 = vcmp.eq.f32.partialorder %v142, 8.507059e+37
  %v144 = vand.u32 %v132, 2147483648
  %v145 = vor.u32 1.1754944e-38, %v144
  %v146 = vsel %vm143, %v145, %v141
  %v147 = vmul.f32 %v122, %v146
  %v148 = vmin.f32 %v147, 1.0
  %v149 = vmax.f32 %v148, -1.0
  %v150 = vadd.f32 %v109, 1.0
  %v151 = vadd.f32 %v149, 1.0
  %v152 = vmul.f32 %v66, %v150
  %v153 = vmul.f32 %v67, %v151
  %v154 = vsel %vm36, %v152, 0.0
  %155 = vadd.xlane.f32.xlu0 %v154
  %v156 = vpop.xlane.xlu0 %155
  %v157 = vsel %vm36, %v153, 0.0
  %158 = vadd.xlane.f32.xlu0 %v157
  %v159 = vpop.xlane.xlu0 %158
  %v160 = vmul.f32 %v152, %v152
  %v161 = vmul.f32 %v153, %v153
  %v162 = vsel %vm36, %v160, 0.0
  %163 = vadd.xlane.f32.xlu0 %v162
  %v164 = vpop.xlane.xlu0 %163
  %v165 = vsel %vm36, %v161, 0.0
  %166 = vadd.xlane.f32.xlu0 %v165
  %v167 = vpop.xlane.xlu0 %166
  %v168 = vmul.f32 %v156, 0.03125
  %v169 = vmul.f32 %v159, 0.03125
  %v170 = vmul.f32 %v164, 0.03125
  %v171 = vmul.f32 %v167, 0.03125
  %v172 = vmul.f32 %v168, %v168
  %v173 = vmul.f32 %v169, %v169
  %v174 = vsub.f32 %v170, %v172
  %v175 = vsub.f32 %v171, %v173
  %v176 = vmax.f32 %v174, 0.0
  %v177 = vmax.f32 %v175, 0.0
  %v178 = vsub.f32 %v152, %v168
  %v179 = vsub.f32 %v153, %v169
  %v180 = vadd.f32 %v176, 1e-05
  %v181 = vadd.f32 %v177, 1e-05
  %v182 = vrsqrt.pop %v180
  %v183 = vmul.f32 %v182, %v180
  %v184 = vmul.f32 %v183, %v182
  %v185 = vmul.f32 0.5, %v184
  %v186 = vsub.f32 1.5, %v185
  %v187 = vmul.f32 %v182, %v186
  %vm188 = vweird.f32 %v180
  %vm189 = vweird.f32 %v182
  %vm190 = vmor %vm188, %vm189
  %v191 = vsel %vm190, %v182, %v187
  %v192 = vrsqrt.pop %v181
  %v193 = vmul.f32 %v192, %v181
  %v194 = vmul.f32 %v193, %v192
  %v195 = vmul.f32 0.5, %v194
  %v196 = vsub.f32 1.5, %v195
  %v197 = vmul.f32 %v192, %v196
  %vm198 = vweird.f32 %v181
  %vm199 = vweird.f32 %v192
  %vm200 = vmor %vm198, %vm199
  %v201 = vsel %vm200, %v192, %v197
  %v202 = vmul.f32 %v178, %v191
  %v203 = vmul.f32 %v179, %v201
  %v204 = vld [vmem:[%s3] sm:$0x1]
  %v206 = vperm.slane %v204, 0
  %v208 = vmul.f32 %v202, %v206
  %v209 = vmul.f32 %v203, %v206
  %v210 = vld [vmem:[%s4] sm:$0x1]
  %v212 = vperm.slane %v210, 0
  %v214 = vadd.f32 %v208, %v212
  %v215 = vadd.f32 %v209, %v212
  %v216 = vld [vmem:[%s5] sm:$0xff]
  %v217 = vld [vmem:[%s5 + $0x8] sm:$0xff]
  %v218 = vld [vmem:[%s5 + $0x10] sm:$0xff]
  %v219 = vld [vmem:[%s5 + $0x18] sm:$0xff]
  %v220 = vld [vmem:[%s6] sm:$0x1]
  %v222 = vperm.slane %v220, 0
  %v225 = vsel %vm36, %v214, 0
  %v228 = vsel %vm36, %v215, 0
  %230 = vmatpush.msra.mxu0 0.0
  %231 = vmatpush.msra.mxu0 0.0
  %232 = vmatpush.msra.mxu0 0.0
  %233 = vmatpush.msra.mxu0 0.0
  %234 = vmatpush.msra.mxu0 0.0
  %235 = vmatpush.msra.mxu0 0.0
  %236 = vmatpush.msra.mxu0 0.0
  %237 = vmatpush.msra.mxu0 0.0
  %238 = vmatpush.msra.mxu0 0.0
  %239 = vmatpush.msra.mxu0 0.0
  %240 = vmatpush.msra.mxu0 0.0
  %241 = vmatpush.msra.mxu0 0.0
  %242 = vmatpush.msra.mxu0 %v219
  %243 = vmatpush.msra.mxu0 %v218
  %244 = vmatpush.msra.mxu0 %v217
  %245 = vmatpush.msra.mxu0 %v216
  %246 = vmatmul.f32.gmra.mxu0 %v225
  %v247 = vpop.f32.mrf.mxu0
  %v248 = vadd.f32 %v222, %v247
  %249 = vmatmul.f32.gmra.mxu0 %v228
  %v250 = vpop.f32.mrf.mxu0
  %v251 = vadd.f32 %v222, %v250
  %252 = vdwg.mxu0
  %253 = vst [vmem:[%s7] sm:$0xff] %v248
  %254 = vst [vmem:[%s7 + $0x8] sm:$0xff] %v251
  // Predicated region
  $region30: #{gelu_mlp.1} parent=0 // pred_check
    _
  $region31: #{gelu_mlp.1} parent=0 // pred_check_branch
    %256 = sbr.rel (0) target = $region33
  $region32: #{gelu_mlp.1} parent=0 // pred_region
    _
  $region33: #{gelu_mlp.1} parent=0 // pred_fallthru
    _
  // Predicated region
  $region34: #{gelu_mlp.1} parent=0 // pred_check
    _
  $region35: #{gelu_mlp.1} parent=0 // pred_check_branch
    %258 = sbr.rel (0) target = $region37
  $region36: #{gelu_mlp.1} parent=0 // pred_region
    _
  $region37: #{gelu_mlp.1} parent=0 // pred_fallthru
    _

</llo_original>
